<compile_context>
chip_gen: v7x
topology: tpu7x:2x2x1
jax: 0.10.0
libtpu: 0.0.40
codegen_flags: <defaults>
</compile_context>

<pallas_src>
import jax
import jax.numpy as jnp
from jax.experimental import pallas as pl
from jax.experimental.pallas import tpu as pltpu


def _make_prefix_copy_kernel(sl: int):
    """Kernel that DMAs rows [0, sl) of the HBM table straight into the HBM output."""

    def kernel(emb_hbm_ref, out_hbm_ref, sem):
        # emb_hbm_ref: (seq_len, model_dim) in HBM (pl.ANY)
        # out_hbm_ref: (sl, model_dim)      in HBM (pl.ANY)
        # sem:         scalar DMA semaphore
        cp = pltpu.make_async_copy(
            emb_hbm_ref.at[pl.ds(0, sl), :],  # contiguous prefix -> one descriptor
            out_hbm_ref,
            sem,
        )
        cp.start()
        cp.wait()

    return kernel


def learned_position_embeddings_forward(x, emb_weight, *, xla_fast_path_bytes: int = 0):
    """Equivalent of LearnedPositionEmbeddings.forward(x).

    x:           any array whose axis 1 is the sequence length (only its shape is used).
    emb_weight:  (seq_len, model_dim) embedding table.
    Returns:     (sl, model_dim) == emb_weight[:sl] with sl = x.shape[1].

    xla_fast_path_bytes: if > 0 and the output is smaller than this many bytes,
    skip the custom call entirely and return a plain XLA slice (already at
    roofline for tiny outputs).  Default 0 so the Pallas kernel always runs.
    """
    sl = int(x.shape[1])
    seq_len, model_dim = emb_weight.shape
    if sl > seq_len:
        # nn.Embedding would raise on out-of-range indices at runtime; TPU has no
        # runtime bounds check, so guard statically (sl is static at trace time).
        raise ValueError(f"sequence length {sl} exceeds table rows {seq_len}")

    out_bytes = sl * model_dim * jnp.dtype(emb_weight.dtype).itemsize
    if xla_fast_path_bytes > 0 and out_bytes < xla_fast_path_bytes:
        # Tiny output: pallas_call launch overhead dwarfs the copy itself.
        return emb_weight[:sl]

    return pl.pallas_call(
        _make_prefix_copy_kernel(sl),
        out_shape=jax.ShapeDtypeStruct((sl, model_dim), emb_weight.dtype),
        in_specs=[pl.BlockSpec(memory_space=pl.ANY)],   # raw HBM ref, no auto-DMA
        out_specs=pl.BlockSpec(memory_space=pl.ANY),    # raw HBM ref, written by DMA
        scratch_shapes=[pltpu.SemaphoreType.DMA],       # one DMA-completion semaphore
    )(emb_weight)


if __name__ == "__main__":
    key = jax.random.PRNGKey(0)
    k_emb, k_x = jax.random.split(key)

    # Module config (small, consistent with nn.Embedding(seq_len, model_dim)):
    seq_len, model_dim = 16, 32
    batch, sl = 2, 8

    # Deterministic parameter init: normal(mean=0, std=0.02), like __init__.
    emb_weight = (0.02 * jax.random.normal(k_emb, (seq_len, model_dim))).astype(jnp.float32)

    # x: (batch, seq) token ids -- only x.shape[1] is used by forward().
    x = jax.random.randint(k_x, (batch, sl), 0, seq_len, dtype=jnp.int32)

    # Run the Pallas kernel path (xla_fast_path_bytes=0 -> kernel always used).
    out = learned_position_embeddings_forward(x, emb_weight)
    out = jax.block_until_ready(out)

    # Reference: emb(arange(sl)) == first sl rows of the table (bit-exact copy).
    ref = emb_weight[:sl]
    assert out.shape == (sl, model_dim), out.shape
    assert out.dtype == emb_weight.dtype
    assert bool(jnp.array_equal(out, ref)), "mismatch vs reference gather"

    # TODO(synk): get_fixed_embedding(ind, dev) (single-row lookup) is not part of
    # forward() and is left to a plain XLA index, e.g. emb_weight[ind][None, None].

    print("KERNEL_OK")
</pallas_src>

<mosaic_0001>
module attributes {stable_mosaic.version = 11 : i64} {
  func.func @kernel(%arg0: memref<16x32xf32, #tpu.memory_space<any>>, %arg1: memref<8x32xf32, #tpu.memory_space<any>>, %arg2: memref<!tpu.dma_semaphore, #tpu.memory_space<semaphore_mem>>) attributes {dimension_semantics = [], scalar_prefetch = 0 : i64, scratch_operands = 1 : i64, tpu.core_type = #tpu.core_type<tc>} {
    %c0_i32 = arith.constant 0 : i32
    %c0_i32_0 = arith.constant 0 : i32
    %0 = tpu.memref_slice %arg0[%c0_i32, %c0_i32_0] : memref<16x32xf32, #tpu.memory_space<any>> -> memref<8x32xf32, #tpu.memory_space<any>>
    tpu.enqueue_dma source(%0 : memref<8x32xf32, #tpu.memory_space<any>>) target(%arg1 : memref<8x32xf32, #tpu.memory_space<any>>) target_semaphore(%arg2 : memref<!tpu.dma_semaphore, #tpu.memory_space<semaphore_mem>>)
    %c0_i32_1 = arith.constant 0 : i32
    %c0_i32_2 = arith.constant 0 : i32
    %1 = tpu.memref_slice %arg0[%c0_i32_1, %c0_i32_2] : memref<16x32xf32, #tpu.memory_space<any>> -> memref<8x32xf32, #tpu.memory_space<any>>
    tpu.wait_dma2 semaphore(%arg2 : memref<!tpu.dma_semaphore, #tpu.memory_space<semaphore_mem>>) src(%1 : memref<8x32xf32, #tpu.memory_space<any>>) dst(%arg1 : memref<8x32xf32, #tpu.memory_space<any>>)
    return
  }
}

</mosaic_0001>

<llo_original>
// kernel: tpu_custom_call.1
$region0: #{tpu_custom_call.1}
  #allocation0 [shape = 'u32[]', space=smem, size = 0x4, offset = 0x4, fixed_abs, tag = 'smem constant byte address 0x4 - core index']
  #allocation1 [shape = 'u32[144,128]{1,0:T(1,128)}', space=vmem, size = 0x12000, scoped, tag = 'internal scratch']
  #allocation2 [shape = 's32[1]{0}', space=sflag, size = 0x4, scoped, tag = 'scratch operand']
  #allocation3 [shape = 's32[]', space=sflag, size = 0x4, offset = 0, fixed_abs, tag = 'sflag constant byte address 0x0 - dummy sync flag']
  #allocation4 [shape = 'u32[0]{0}', space=smem, size = 0, offset = 0, fixed_abs, tag = 'smem constant byte address 0x0 - null']
  %s0 = inlined_call_operand.hbm [shape: f32[16,32], index: 0, kind: input, shape index: {}]
  %s1 = inlined_call_operand.hbm [shape: f32[8,32], index: 1, kind: output, shape index: {}]
  %s2 = sld [smem:[#allocation0]]
  $region2: #{tpu_custom_call.1} parent=0
    _
  %s4 = ssub.s32 1, %s2
  %s5 = scalar_select 0, %s4, %s2
  %s7 = sshll.u32 1, 14
  %s8 = sxor.u32 4294967295, %s7
  %s11 = sshll.u32 3, 24
  %s12 = sxor.u32 4294967295, %s11
  %s13 = sand.u32 0, %s12
  %s15 = sor.u32 %s13, 0
  %18 = dma.general %s0, 128, %s1, [#allocation2], [#allocation3], [#allocation4], %s15, 0
  %s19 = smul.u32 8, 1
  %s20 = sshll.u32 %s19, 4
  %21 = dma.done [#allocation2], %s20
  %22 = vsyncmov [#allocation2]
  %s23 = vpop.sfrf %22
  %p24 = scmp.eq.s32.totalorder %s23, 0
  %p25 = pneg %p24
  %27 = shalt.err (%p25)

</llo_original>
